<compile_context>
chip_gen: v7x
topology: tpu7x:2x2x1
jax: 0.10.0
libtpu: 0.0.40
codegen_flags: <defaults>
</compile_context>

<pallas_src>
import functools

import jax
import jax.numpy as jnp
from jax.experimental import pallas as pl
from jax.experimental.pallas import tpu as pltpu


def _ssn_kernel(x_ref, gamma_ref, beta_ref, o_ref, *, inv_n, inv_nm1, eps):
    # x_ref block: (B, TC, L) -> TC sub-spectral channels, full batch, flattened
    # (sub-height * width) spatial axis on the lane dimension.
    x = x_ref[...].astype(jnp.float32)

    # Single traversal: per-channel sum and sum-of-squares (XLU reductions).
    s = jnp.sum(x, axis=(0, 2), keepdims=True)          # (1, TC, 1)
    ss = jnp.sum(x * x, axis=(0, 2), keepdims=True)     # (1, TC, 1)

    mean = s * inv_n
    # Unbiased variance (divide by N-1), matching torch.var's default.
    var = jnp.maximum(ss - s * mean, 0.0) * inv_nm1
    inv_std = jax.lax.rsqrt(var + eps)                  # EUP

    g = gamma_ref[...][None]                            # (1, TC, 1)
    b = beta_ref[...][None]                             # (1, TC, 1)
    scale = inv_std * g
    shift = b - mean * scale

    # Single fused elementwise pass; lane-dense unmasked store.
    o_ref[...] = (x * scale + shift).astype(o_ref.dtype)


def _pick_channel_tile(cs, bytes_per_channel, target_bytes=2 << 20):
    """Largest channel tile that divides CS, is a multiple of 8 (sublane
    constraint on the second-to-last block dim) and keeps one x block under
    `target_bytes` so double-buffered in/out + f32 temps stay comfortably
    inside the scoped-VMEM default on every TPU generation (incl. v7x)."""
    if cs % 8 != 0:
        return cs  # full channel axis (block dim == array dim is always legal)
    best = 8
    for tc in range(8, cs + 1, 8):
        if cs % tc == 0 and tc * bytes_per_channel <= target_bytes:
            best = tc
    return best


def sub_spectral_norm(x, gamma, beta, *, num_subspecs: int = 2, eps: float = 1e-5):
    """Pallas implementation of SubSpectralNorm.forward.

    x:     (B, C, H, W)  NCHW, H divisible by num_subspecs
    gamma: (1, C*num_subspecs, 1, 1)
    beta:  (1, C*num_subspecs, 1, 1)
    """
    B, C, H, W = x.shape
    S = num_subspecs
    CS = C * S
    Hs = H // S
    L = Hs * W                      # lane-dense flattened spatial axis

    xv = x.reshape(B, CS, L)        # free reshape (contiguous trailing dims)
    g = gamma.reshape(CS, 1).astype(jnp.float32)
    b = beta.reshape(CS, 1).astype(jnp.float32)

    itemsize = jnp.dtype(x.dtype).itemsize
    TC = _pick_channel_tile(CS, B * L * itemsize)
    grid = (CS // TC,)

    n = B * L
    kernel = functools.partial(
        _ssn_kernel, inv_n=1.0 / n, inv_nm1=1.0 / (n - 1), eps=eps)

    out = pl.pallas_call(
        kernel,
        out_shape=jax.ShapeDtypeStruct((B, CS, L), x.dtype),
        grid=grid,
        in_specs=[
            # TC sub-spectral channels per grid step, full batch / spatial.
            pl.BlockSpec((B, TC, L), lambda c: (0, c, 0)),
            pl.BlockSpec((TC, 1), lambda c: (c, 0)),
            pl.BlockSpec((TC, 1), lambda c: (c, 0)),
        ],
        out_specs=pl.BlockSpec((B, TC, L), lambda c: (0, c, 0)),
        compiler_params=pltpu.CompilerParams(dimension_semantics=("parallel",)),
    )(xv, g, b)

    return out.reshape(B, C, H, W)


def sub_spectral_norm_ref(x, gamma, beta, *, num_subspecs: int = 2, eps: float = 1e-5):
    """Pure-JAX reference (mirrors the PyTorch forward exactly)."""
    B, C, H, W = x.shape
    S = num_subspecs
    xv = x.reshape(B, C * S, H // S, -1)
    mean = xv.mean(axis=(0, 2, 3), keepdims=True)
    var = xv.var(axis=(0, 2, 3), keepdims=True, ddof=1)   # unbiased, like torch.var
    y = (xv - mean) / jnp.sqrt(var + eps)
    y = y * gamma.reshape(1, C * S, 1, 1) + beta.reshape(1, C * S, 1, 1)
    return y.reshape(B, C, H, W)


if __name__ == "__main__":
    # Small shapes consistent with the module: B=2, C=4, H=W=16, num_subspecs=2.
    B, C, H, W = 2, 4, 16, 16
    S = 2
    CS = C * S
    eps = 1e-5

    key = jax.random.PRNGKey(0)
    x = jax.random.normal(key, (B, C, H, W), dtype=jnp.float32)

    # Deterministic parameter init (module shapes: (1, C*S, 1, 1)); slight
    # perturbation from the ones/zeros default so the affine path is exercised.
    gamma = (jnp.ones((1, CS, 1, 1), jnp.float32)
             + 0.05 * jnp.arange(CS, dtype=jnp.float32).reshape(1, CS, 1, 1))
    beta = 0.01 * jnp.arange(CS, dtype=jnp.float32).reshape(1, CS, 1, 1)

    out = sub_spectral_norm(x, gamma, beta, num_subspecs=S, eps=eps)
    out = jax.block_until_ready(out)

    ref = sub_spectral_norm_ref(x, gamma, beta, num_subspecs=S, eps=eps)
    assert out.shape == (B, C, H, W)
    # One-pass (sum / sum-of-squares) vs two-pass reference stats differ by a
    # few f32 ulps; 1e-4 still easily catches semantic errors (e.g. N vs N-1).
    assert jnp.allclose(out, ref, atol=1e-4, rtol=1e-4), "mismatch vs reference"

    print("KERNEL_OK")
</pallas_src>

<mosaic_0001>
module attributes {stable_mosaic.version = 11 : i64} {
  func.func @_ssn_kernel(%arg0: i32, %arg1: memref<2x8x128xf32, #tpu.memory_space<vmem>>, %arg2: memref<8x1xf32, #tpu.memory_space<vmem>>, %arg3: memref<8x1xf32, #tpu.memory_space<vmem>>, %arg4: memref<2x8x128xf32, #tpu.memory_space<vmem>>) attributes {dimension_semantics = [#tpu.dimension_semantics<parallel>], iteration_bounds = array<i64: 1>, scalar_prefetch = 0 : i64, scratch_operands = 0 : i64, tpu.core_type = #tpu.core_type<tc>, window_params = [{transform_indices = @transform_0, window_bounds = array<i64: 2, 8, 128>}, {transform_indices = @transform_1, window_bounds = array<i64: 8, 1>}, {transform_indices = @transform_2, window_bounds = array<i64: 8, 1>}, {transform_indices = @transform_3, window_bounds = array<i64: 2, 8, 128>}]} {
    %c0 = arith.constant 0 : index
    %c0_0 = arith.constant 0 : index
    %c0_1 = arith.constant 0 : index
    %0 = vector.load %arg1[%c0, %c0_0, %c0_1] : memref<2x8x128xf32, #tpu.memory_space<vmem>>, vector<2x8x128xf32>
    %cst = arith.constant dense<0.000000e+00> : vector<8xf32>
    %1 = vector.multi_reduction <add>, %0, %cst [0, 2] : vector<2x8x128xf32> to vector<8xf32>
    %2 = vector.shape_cast %1 : vector<8xf32> to vector<1x8x1xf32>
    %3 = arith.mulf %0, %0 : vector<2x8x128xf32>
    %cst_2 = arith.constant dense<0.000000e+00> : vector<8xf32>
    %4 = vector.multi_reduction <add>, %3, %cst_2 [0, 2] : vector<2x8x128xf32> to vector<8xf32>
    %5 = vector.shape_cast %4 : vector<8xf32> to vector<1x8x1xf32>
    %cst_3 = arith.constant 3.906250e-03 : f32
    %6 = vector.broadcast %cst_3 : f32 to vector<1x8x1xf32>
    %7 = arith.mulf %2, %6 : vector<1x8x1xf32>
    %8 = arith.mulf %2, %7 : vector<1x8x1xf32>
    %9 = arith.subf %5, %8 : vector<1x8x1xf32>
    %cst_4 = arith.constant 0.000000e+00 : f32
    %10 = vector.broadcast %cst_4 : f32 to vector<1x8x1xf32>
    %11 = arith.maximumf %9, %10 : vector<1x8x1xf32>
    %cst_5 = arith.constant 0.00392156886 : f32
    %12 = vector.broadcast %cst_5 : f32 to vector<1x8x1xf32>
    %13 = arith.mulf %11, %12 : vector<1x8x1xf32>
    %cst_6 = arith.constant 9.99999974E-6 : f32
    %14 = vector.broadcast %cst_6 : f32 to vector<1x8x1xf32>
    %15 = arith.addf %13, %14 : vector<1x8x1xf32>
    %16 = math.rsqrt %15 : vector<1x8x1xf32>
    %c0_7 = arith.constant 0 : index
    %c0_8 = arith.constant 0 : index
    %17 = vector.load %arg2[%c0_7, %c0_8] : memref<8x1xf32, #tpu.memory_space<vmem>>, vector<8x1xf32>
    %18 = vector.shape_cast %17 : vector<8x1xf32> to vector<1x8x1xf32>
    %c0_9 = arith.constant 0 : index
    %c0_10 = arith.constant 0 : index
    %19 = vector.load %arg3[%c0_9, %c0_10] : memref<8x1xf32, #tpu.memory_space<vmem>>, vector<8x1xf32>
    %20 = vector.shape_cast %19 : vector<8x1xf32> to vector<1x8x1xf32>
    %21 = arith.mulf %16, %18 : vector<1x8x1xf32>
    %22 = arith.mulf %7, %21 : vector<1x8x1xf32>
    %23 = arith.subf %20, %22 : vector<1x8x1xf32>
    %24 = vector.broadcast %21 : vector<1x8x1xf32> to vector<2x8x128xf32>
    %25 = arith.mulf %0, %24 : vector<2x8x128xf32>
    %26 = vector.broadcast %23 : vector<1x8x1xf32> to vector<2x8x128xf32>
    %27 = arith.addf %25, %26 : vector<2x8x128xf32>
    %c0_11 = arith.constant 0 : index
    %c0_12 = arith.constant 0 : index
    %c0_13 = arith.constant 0 : index
    %28 = vector.load %arg4[%c0_11, %c0_12, %c0_13] : memref<2x8x128xf32, #tpu.memory_space<vmem>>, vector<2x8x128xf32>
    tpu.vector_store %arg4[%c0_11, %c0_12, %c0_13], %27 {strides = array<i32>} : memref<2x8x128xf32, #tpu.memory_space<vmem>>, vector<2x8x128xf32>,
    return
  }
  func.func @transform_0(%arg0: i32) -> (i32, i32, i32) {
    %c0_i32 = arith.constant 0 : i32
    %c0_i32_0 = arith.constant 0 : i32
    %c0_i32_1 = arith.constant 0 : i32
    return %c0_i32, %arg0, %c0_i32_0 : i32, i32, i32
  }
  func.func @transform_1(%arg0: i32) -> (i32, i32) {
    %c0_i32 = arith.constant 0 : i32
    %c0_i32_0 = arith.constant 0 : i32
    return %arg0, %c0_i32 : i32, i32
  }
  func.func @transform_2(%arg0: i32) -> (i32, i32) {
    %c0_i32 = arith.constant 0 : i32
    %c0_i32_0 = arith.constant 0 : i32
    return %arg0, %c0_i32 : i32, i32
  }
  func.func @transform_3(%arg0: i32) -> (i32, i32, i32) {
    %c0_i32 = arith.constant 0 : i32
    %c0_i32_0 = arith.constant 0 : i32
    %c0_i32_1 = arith.constant 0 : i32
    return %c0_i32, %arg0, %c0_i32_0 : i32, i32, i32
  }
}

</mosaic_0001>

<llo_original>
// kernel: tpu_custom_call.1
$region0: #{tpu_custom_call.1}
  #allocation0 [shape = 'u32[]', space=smem, size = 0x4, offset = 0x4, fixed_abs, tag = 'smem constant byte address 0x4 - core index']
  #allocation1 [shape = 'u32[144,128]{1,0:T(1,128)}', space=vmem, size = 0x12000, scoped, tag = 'internal scratch']
  %s0 = inlined_call_operand.vmem [shape: f32[2,8,128], index: 0, kind: input, shape index: {}]
  %s1 = inlined_call_operand.vmem [shape: f32[8,1], index: 1, kind: input, shape index: {}]
  %s2 = inlined_call_operand.vmem [shape: f32[8,1], index: 2, kind: input, shape index: {}]
  %s3 = inlined_call_operand.hbm [shape: f32[2,8,128], index: 3, kind: output, shape index: {}]
  %s4 = sld [smem:[#allocation0]]
  $region22: #{tpu_custom_call.1} parent=0
    _
  %s6 = ssub.s32 1, %s4
  %s7 = scalar_select 0, %s6, %s4
  $region1: #{tpu_custom_call.1} parent=0
    #allocation2 [shape = 'u8[8192]{0}', space=vmem, size = 0x2000, scoped, tag = 'output window, operand 0, single buffered']
    #allocation3 [shape = 's32[1]{0}', space=sflag, size = 0x4, scoped, tag = 'scoped memory for tpu_custom_call.1']
    %8 = vsyncpa [#allocation3], 0
    // Predicated region
    $region2: #{tpu_custom_call.1} parent=1 // pred_check
      _
    $region3: #{tpu_custom_call.1} parent=1 // pred_check_branch
      %10 = sbr.rel (0) target = $region5
    $region4: #{tpu_custom_call.1} parent=1 // pred_region
      _
    $region5: #{tpu_custom_call.1} parent=1 // pred_fallthru
      _
    // Predicated region
    $region6: #{tpu_custom_call.1} parent=1 // pred_check
      _
    $region7: #{tpu_custom_call.1} parent=1 // pred_check_branch
      %12 = sbr.rel (0) target = $region9
    $region8: #{tpu_custom_call.1} parent=1 // pred_region
      _
    $region9: #{tpu_custom_call.1} parent=1 // pred_fallthru
      _
    // Predicated region
    $region10: #{tpu_custom_call.1} parent=1 // pred_check
      _
    $region11: #{tpu_custom_call.1} parent=1 // pred_check_branch
      %14 = sbr.rel (0) target = $region13
    $region12: #{tpu_custom_call.1} parent=1 // pred_region
      _
    $region13: #{tpu_custom_call.1} parent=1 // pred_fallthru
      _
    %v15 = vld [vmem:[%s0] sm:$0xff]
    %v16 = vld [vmem:[%s0 + $0x8] sm:$0xff]
    %v17 = vadd.f32 %v15, %v16
    %18 = vadd.xlane.f32.xlu0 %v17
    %v19 = vpop.xlane.xlu0 %18
    %v20 = vmul.f32 %v15, %v15
    %v21 = vmul.f32 %v16, %v16
    %v22 = vadd.f32 %v20, %v21
    %23 = vadd.xlane.f32.xlu0 %v22
    %v24 = vpop.xlane.xlu0 %23
    %v25 = vmul.f32 %v19, 0.00390625
    %v26 = vmul.f32 %v19, %v25
    %v27 = vsub.f32 %v24, %v26
    %v28 = vmax.f32 %v27, 0.0
    %v29 = vmul.f32 %v28, 0.003921569
    %v30 = vadd.f32 %v29, 1e-05
    %v31 = vrsqrt.pop %v30
    %v32 = vld [vmem:[%s1] sm:$0xff]
    %v33 = vld [vmem:[%s2] sm:$0xff]
    %v34 = vmul.f32 %v31, %v32
    %v35 = vmul.f32 %v25, %v34
    %v36 = vsub.f32 %v33, %v35
    %38 = vset.pattern.permute.xlu0 0
    %39 = vperm.xlu0 %38, %v34
    %v40 = vpop.permute.xlu0 %39
    %v42 = vmul.f32 %v15, %v40
    %v43 = vmul.f32 %v16, %v40
    %45 = vset.pattern.permute.xlu0 0
    %46 = vperm.xlu0 %45, %v36
    %v47 = vpop.permute.xlu0 %46
    %v49 = vadd.f32 %v42, %v47
    %v50 = vadd.f32 %v43, %v47
    %51 = vst [vmem:[#allocation2] sm:$0xff] %v49
    %52 = vst [vmem:[#allocation2 + $0x8] sm:$0xff] %v50
    // Predicated region
    $region14: #{tpu_custom_call.1} parent=1 // pred_check
      _
    $region15: #{tpu_custom_call.1} parent=1 // pred_check_branch
      %54 = sbr.rel (0) target = $region17
    $region16: #{tpu_custom_call.1} parent=1 // pred_region
      %s56 = ssub.s32 256, 256
      %57 = vsyncadd [#allocation3], %s56
      %s58 = sshll.u32 [#allocation2], 4
      %s59 = int_to_ptr.vmem [resolvable:$true] %s58
      %64 = dma.vmem_to_hbm [thread:$0]  %s59, 256, %s3, [#allocation3], 128, 128, 8
    $region17: #{tpu_custom_call.1} parent=1 // pred_fallthru
      _
    // Predicated region
    $region18: #{tpu_custom_call.1} parent=1 // pred_check
      _
    $region19: #{tpu_custom_call.1} parent=1 // pred_check_branch
      %66 = sbr.rel (0) target = $region21
    $region20: #{tpu_custom_call.1} parent=1 // pred_region
      %67 = dma.done [#allocation3], 256
    $region21: #{tpu_custom_call.1} parent=1 // pred_fallthru
      _
    %68 = vsyncpa [#allocation3], 1

</llo_original>
